<compile_context>
chip_gen: v7x
topology: tpu7x:2x2x1
jax: 0.10.0
libtpu: 0.0.40
codegen_flags: <defaults>
</compile_context>

<pallas_src>
import jax
import jax.numpy as jnp
from jax import lax
from jax.experimental import pallas as pl
from jax.experimental.pallas import tpu as pltpu


_HALO_ROWS = 8  # sublane-aligned halo tile; only its first row is consumed


def _round_up(x, m):
    return (x + m - 1) // m * m


def _downsample_kernel(xa_ref, xh_ref, w01_ref, w2_ref, b_ref, o_ref):
    """One (tl, C) output tile of Conv1d(C, C, 3, stride=2, padding=1).

    xa_ref : (tl, 2C)  pair rows r = [x_pad[2r] | x_pad[2r+1]], channels-last
    xh_ref : (8, 2C)   halo: pair rows starting right after this tile
    w01_ref: (2C, C)   [W_tap0.T ; W_tap1.T]
    w2_ref : (2C, C)   [W_tap2.T ; 0]   (zero tail -> no sub-128 lane slicing)
    b_ref  : (1, C)    bias, f32
    o_ref  : (tl, C)   lane-dense output tile (C on lanes)
    """
    a = xa_ref[...]
    h = xh_ref[...]
    # Tap 2 of output row r lives in pair row r+1: shift the tile up by one
    # row and take the first halo row for the tile's last output row.
    x2 = jnp.concatenate([a[1:, :], h[0:1, :]], axis=0)
    acc = jnp.dot(a, w01_ref[...], preferred_element_type=jnp.float32)
    acc = acc + jnp.dot(x2, w2_ref[...], preferred_element_type=jnp.float32)
    o_ref[...] = (acc + b_ref[...]).astype(o_ref.dtype)


def _resident_spec(arr):
    """Full-array resident block with a constant index map.

    Weights >= 1 MiB are single-buffered (pl.Buffered(1)): with a constant
    index map the block is never re-fetched, so the second pipeline buffer is
    wasted VMEM (matters for C=1024 on v7x's 64 MiB VMEM).  Small arrays keep
    the default pipelining (also keeps the tiny test shape on the plain path).
    """
    idx_map = lambda b, i, _nd=arr.ndim: (0,) * _nd
    if arr.size * arr.dtype.itemsize >= (1 << 20):
        return pl.BlockSpec(arr.shape, idx_map, pipeline_mode=pl.Buffered(1))
    return pl.BlockSpec(arr.shape, idx_map)


def prepare_downsample1d_params(weight, bias, mxu_dtype=jnp.bfloat16):
    """weight: (C, C, 3) PyTorch Conv1d (out, in, k) layout; bias: (C,).

    Returns (w01, w2, bias2) laid out for the kernel.  Do this once per
    checkpoint.  bf16 by default on every TPU generation: the MXU is
    bf16-native (f32 matmul is a slower multi-pass mode) and bf16 halves
    HBM/VMEM bytes on a memory-bound op; accumulation stays f32.
    """
    c_out, c_in, k = weight.shape
    assert k == 3 and c_out == c_in, (weight.shape,)
    wt = jnp.transpose(weight, (2, 1, 0))                       # (k, Cin, Cout)
    w01 = wt[0:2].reshape(2 * c_in, c_out)                      # taps 0, 1
    w2 = jnp.concatenate([wt[2], jnp.zeros_like(wt[2])], axis=0)  # tap 2 + 0
    if mxu_dtype is not None:
        w01 = w01.astype(mxu_dtype)
        w2 = w2.astype(mxu_dtype)
    b2 = bias.reshape(1, c_out).astype(jnp.float32)
    return w01, w2, b2


def downsample1d_nlc(x_nlc, params, *, row_tile=512):
    """Channels-last Conv1d(dim, dim, 3, stride=2, padding=1).

    x_nlc : (N, L, C) channels-last activation.
    params: output of prepare_downsample1d_params.
    Returns (N, L_out, C) channels-last, dtype of x_nlc.
    """
    n, l, c = x_nlc.shape
    w01, w2, b2 = params
    assert w01.shape == (2 * c, c) and w2.shape == (2 * c, c), (w01.shape,)
    l_out = (l - 1) // 2 + 1

    # Row tile: multiple of 8, never a single huge block (no tm=m fallback);
    # shrink until the (N, row_blocks) grid has >= 2 parallel steps so both
    # v7x TensorCores get work.
    tl = max(8, min(_round_up(row_tile, 8), _round_up(l_out, 8)))
    while n * ((l_out + tl - 1) // tl) < 2 and tl > 8:
        tl = max(8, _round_up(tl // 2, 8))
    nb = (l_out + tl - 1) // tl
    rows = nb * tl + _HALO_ROWS            # padded pair-rows per batch example

    # One fused XLA pass: cast (optional) + pad; the pair-reshape is free.
    act_dtype = w01.dtype
    xin = x_nlc.astype(act_dtype) if x_nlc.dtype != act_dtype else x_nlc
    x_p = jnp.pad(xin, ((0, 0), (1, 2 * rows - l - 1), (0, 0)))
    x_r = x_p.reshape(n, rows, 2 * c)      # pair-row r = [pos 2r | pos 2r+1]

    halo_step = tl // _HALO_ROWS

    # Explicit VMEM budget (default scoped limit is 16/32 MiB; v7x physical
    # VMEM is 64 MiB, so cap well below that).
    act_b = x_r.dtype.itemsize
    out_b = jnp.dtype(x_nlc.dtype).itemsize
    w_each = 2 * c * c * act_b
    w_bufs = 1 if w_each >= (1 << 20) else 2
    need = (2 * tl * 2 * c * act_b            # activation tile, double-buffered
            + 2 * _HALO_ROWS * 2 * c * act_b  # halo tile, double-buffered
            + 2 * w_bufs * w_each             # resident w01 + w2
            + 2 * tl * c * out_b              # output tile, double-buffered
            + 4 * c * 4)                      # bias
    vmem_limit = int(min(60 << 20, max(need + (4 << 20), 24 << 20)))

    out = pl.pallas_call(
        _downsample_kernel,
        out_shape=jax.ShapeDtypeStruct((n, nb * tl, c), x_nlc.dtype),
        grid_spec=pltpu.PrefetchScalarGridSpec(
            num_scalar_prefetch=0,
            grid=(n, nb),
            in_specs=[
                # Pair rows [i*tl, (i+1)*tl) of batch b (taps 0/1 + most of 2).
                # TODO(synk): on v7x, pl.Buffered(3) here if DMA is exposed.
                pl.BlockSpec((None, tl, 2 * c), lambda b, i: (b, i, 0)),
                # 8-row halo starting at pair row (i+1)*tl (only row 0 used).
                pl.BlockSpec((None, _HALO_ROWS, 2 * c),
                             lambda b, i: (b, (i + 1) * halo_step, 0)),
                _resident_spec(w01),
                _resident_spec(w2),
                _resident_spec(b2),
            ],
            out_specs=pl.BlockSpec((None, tl, c), lambda b, i: (b, i, 0)),
        ),
        compiler_params=pltpu.CompilerParams(
            dimension_semantics=("parallel", "parallel"),
            vmem_limit_bytes=vmem_limit),
    )(x_r, x_r, w01, w2, b2)

    return out[:, :l_out, :]


def downsample1d(x, weight, bias, *, row_tile=512, mxu_dtype=jnp.bfloat16):
    """PyTorch-layout wrapper: x (N, C, L) -> (N, C, L_out).

    TODO(synk): in the full ConditionalUnet1D pipeline keep activations
    channels-last between Pallas kernels (call downsample1d_nlc directly) or
    fuse this matmul into the tail of the preceding Conv1dBlock kernel; the
    two transposes here exist only to match the isolated PyTorch interface.
    """
    params = prepare_downsample1d_params(weight, bias, mxu_dtype)
    y = downsample1d_nlc(jnp.transpose(x, (0, 2, 1)), params, row_tile=row_tile)
    return jnp.transpose(y, (0, 2, 1))


def _reference(x, weight, bias):
    # Pure-JAX reference of nn.Conv1d(dim, dim, 3, stride=2, padding=1).
    y = lax.conv_general_dilated(
        x, weight,
        window_strides=(2,),
        padding=[(1, 1)],
        dimension_numbers=("NCH", "OIH", "NCH"),
        precision=lax.Precision.HIGHEST)
    return y + bias[None, :, None]


if __name__ == "__main__":
    key = jax.random.PRNGKey(0)
    kx, kw, kb = jax.random.split(key, 3)

    # Small, module-consistent shapes.  NOTE: tiling decisions target the
    # production widths of ConditionalUnet1D (C=256/512/1024, large N*L_out);
    # benchmark/bundle-read there, not at this toy shape.
    N, DIM, L = 2, 8, 16  # batch, channels, length

    x = jax.random.normal(kx, (N, DIM, L), dtype=jnp.float32)
    fan_in = DIM * 3
    bound = 1.0 / (fan_in ** 0.5)
    weight = jax.random.uniform(kw, (DIM, DIM, 3), jnp.float32, -bound, bound)
    bias = jax.random.uniform(kb, (DIM,), jnp.float32, -bound, bound)

    ref = _reference(x, weight, bias)

    # f32-MXU path (mxu_dtype=None).  Typically ~1e-6 accurate; the tolerance
    # is kept deliberately loose so the check is robust across MXU f32
    # emulation modes on different generations while still catching any
    # tap/layout/halo bug (those produce O(1) errors).
    out_f32 = jax.block_until_ready(downsample1d(x, weight, bias, mxu_dtype=None))
    assert out_f32.shape == (N, DIM, L // 2), out_f32.shape
    assert jnp.allclose(out_f32, ref, atol=5e-2, rtol=5e-2), "f32 path mismatch"

    # Default bf16-MXU path (f32 accumulation): expected ~1e-2 absolute
    # deviation vs the f32 PyTorch/XLA reference.
    out_bf16 = jax.block_until_ready(downsample1d(x, weight, bias))
    assert out_bf16.shape == (N, DIM, L // 2), out_bf16.shape
    assert jnp.allclose(out_bf16, ref, atol=5e-2, rtol=5e-2), "bf16 path mismatch"

    print("KERNEL_OK")
</pallas_src>

<mosaic_0001>
module attributes {stable_mosaic.version = 11 : i64} {
  func.func @_downsample_kernel(%arg0: i32, %arg1: i32, %arg2: memref<1x8x16xf32, #tpu.memory_space<vmem>>, %arg3: memref<1x8x16xf32, #tpu.memory_space<vmem>>, %arg4: memref<16x8xf32, #tpu.memory_space<vmem>>, %arg5: memref<16x8xf32, #tpu.memory_space<vmem>>, %arg6: memref<1x8xf32, #tpu.memory_space<vmem>>, %arg7: memref<1x8x8xf32, #tpu.memory_space<vmem>>) attributes {dimension_semantics = [#tpu.dimension_semantics<parallel>, #tpu.dimension_semantics<parallel>], iteration_bounds = array<i64: 2, 1>, scalar_prefetch = 0 : i64, scratch_operands = 0 : i64, tpu.core_type = #tpu.core_type<tc>, window_params = [{transform_indices = @transform_0, window_bounds = array<i64: 1, 8, 16>}, {transform_indices = @transform_1, window_bounds = array<i64: 1, 8, 16>}, {pipeline_mode = #tpu.pipeline_mode<synchronous>, transform_indices = @transform_2, window_bounds = array<i64: 16, 8>}, {pipeline_mode = #tpu.pipeline_mode<synchronous>, transform_indices = @transform_3, window_bounds = array<i64: 16, 8>}, {pipeline_mode = #tpu.pipeline_mode<synchronous>, transform_indices = @transform_4, window_bounds = array<i64: 1, 8>}, {transform_indices = @transform_5, window_bounds = array<i64: 1, 8, 8>}]} {
    %c0 = arith.constant 0 : index
    %c0_0 = arith.constant 0 : index
    %c0_1 = arith.constant 0 : index
    %0 = vector.load %arg2[%c0, %c0_0, %c0_1] : memref<1x8x16xf32, #tpu.memory_space<vmem>>, vector<1x8x16xf32>
    %1 = vector.shape_cast %0 : vector<1x8x16xf32> to vector<8x16xf32>
    %c0_2 = arith.constant 0 : index
    %c0_3 = arith.constant 0 : index
    %c0_4 = arith.constant 0 : index
    %2 = vector.load %arg3[%c0_2, %c0_3, %c0_4] : memref<1x8x16xf32, #tpu.memory_space<vmem>>, vector<1x8x16xf32>
    %3 = vector.shape_cast %2 : vector<1x8x16xf32> to vector<8x16xf32>
    %4 = vector.extract_strided_slice %1 {offsets = [1, 0], sizes = [7, 16], strides = [1, 1]} : vector<8x16xf32> to vector<7x16xf32>
    %5 = vector.extract_strided_slice %3 {offsets = [0, 0], sizes = [1, 16], strides = [1, 1]} : vector<8x16xf32> to vector<1x16xf32>
    %6 = tpu.concatenate %4, %5 in 0 : vector<7x16xf32>, vector<1x16xf32> -> vector<8x16xf32>
    %c0_5 = arith.constant 0 : index
    %c0_6 = arith.constant 0 : index
    %7 = vector.load %arg4[%c0_5, %c0_6] : memref<16x8xf32, #tpu.memory_space<vmem>>, vector<16x8xf32>
    %cst = arith.constant dense<0.000000e+00> : vector<8x8xf32>
    %8 = tpu.matmul %1, %7, %cst {dimension_numbers = #tpu.dot_dimension_numbers<[1], [0], [0], [1], [0, 0, 1, 1], [], []>} : vector<8x16xf32>, vector<16x8xf32>, vector<8x8xf32> -> vector<8x8xf32>
    %c0_7 = arith.constant 0 : index
    %c0_8 = arith.constant 0 : index
    %9 = vector.load %arg5[%c0_7, %c0_8] : memref<16x8xf32, #tpu.memory_space<vmem>>, vector<16x8xf32>
    %cst_9 = arith.constant dense<0.000000e+00> : vector<8x8xf32>
    %10 = tpu.matmul %6, %9, %cst_9 {dimension_numbers = #tpu.dot_dimension_numbers<[1], [0], [0], [1], [0, 0, 1, 1], [], []>} : vector<8x16xf32>, vector<16x8xf32>, vector<8x8xf32> -> vector<8x8xf32>
    %11 = arith.addf %8, %10 : vector<8x8xf32>
    %c0_10 = arith.constant 0 : index
    %c0_11 = arith.constant 0 : index
    %12 = vector.load %arg6[%c0_10, %c0_11] : memref<1x8xf32, #tpu.memory_space<vmem>>, vector<1x8xf32>
    %13 = vector.broadcast %12 : vector<1x8xf32> to vector<8x8xf32>
    %14 = arith.addf %11, %13 : vector<8x8xf32>
    %c0_12 = arith.constant 0 : index
    %c0_13 = arith.constant 0 : index
    %c0_14 = arith.constant 0 : index
    %15 = vector.load %arg7[%c0_12, %c0_13, %c0_14] : memref<1x8x8xf32, #tpu.memory_space<vmem>>, vector<1x8x8xf32>
    %16 = vector.shape_cast %15 : vector<1x8x8xf32> to vector<8x8xf32>
    %17 = vector.shape_cast %14 : vector<8x8xf32> to vector<1x8x8xf32>
    tpu.vector_store %arg7[%c0_12, %c0_13, %c0_14], %17 {strides = array<i32>} : memref<1x8x8xf32, #tpu.memory_space<vmem>>, vector<1x8x8xf32>,
    return
  }
  func.func @transform_0(%arg0: i32, %arg1: i32) -> (i32, i32, i32) {
    %c0_i32 = arith.constant 0 : i32
    %c0_i32_0 = arith.constant 0 : i32
    return %arg0, %arg1, %c0_i32 : i32, i32, i32
  }
  func.func @transform_1(%arg0: i32, %arg1: i32) -> (i32, i32, i32) {
    %c1_i32 = arith.constant 1 : i32
    %0 = arith.addi %arg1, %c1_i32 : i32
    %c1_i32_0 = arith.constant 1 : i32
    %1 = arith.muli %0, %c1_i32_0 : i32
    %c0_i32 = arith.constant 0 : i32
    %c0_i32_1 = arith.constant 0 : i32
    return %arg0, %1, %c0_i32 : i32, i32, i32
  }
  func.func @transform_2(%arg0: i32, %arg1: i32) -> (i32, i32) {
    %c0_i32 = arith.constant 0 : i32
    %c0_i32_0 = arith.constant 0 : i32
    %c0_i32_1 = arith.constant 0 : i32
    return %c0_i32, %c0_i32_0 : i32, i32
  }
  func.func @transform_3(%arg0: i32, %arg1: i32) -> (i32, i32) {
    %c0_i32 = arith.constant 0 : i32
    %c0_i32_0 = arith.constant 0 : i32
    %c0_i32_1 = arith.constant 0 : i32
    return %c0_i32, %c0_i32_0 : i32, i32
  }
  func.func @transform_4(%arg0: i32, %arg1: i32) -> (i32, i32) {
    %c0_i32 = arith.constant 0 : i32
    %c0_i32_0 = arith.constant 0 : i32
    %c0_i32_1 = arith.constant 0 : i32
    return %c0_i32, %c0_i32_0 : i32, i32
  }
  func.func @transform_5(%arg0: i32, %arg1: i32) -> (i32, i32, i32) {
    %c0_i32 = arith.constant 0 : i32
    %c0_i32_0 = arith.constant 0 : i32
    return %arg0, %arg1, %c0_i32 : i32, i32, i32
  }
}

</mosaic_0001>

<llo_original>
// kernel: tpu_custom_call.1
$region0: #{tpu_custom_call.1}
  #allocation0 [shape = 'u32[]', space=smem, size = 0x4, offset = 0x4, fixed_abs, tag = 'smem constant byte address 0x4 - core index']
  #allocation1 [shape = 'u32[144,128]{1,0:T(1,128)}', space=vmem, size = 0x12000, scoped, tag = 'internal scratch']
  %s0 = inlined_call_operand.vmem [shape: f32[2,16,16], index: 0, kind: input, shape index: {}]
  %s1 = inlined_call_operand.hbm [shape: f32[2,16,16], index: 1, kind: input, shape index: {}]
  %s2 = inlined_call_operand.vmem [shape: f32[16,8], index: 2, kind: input, shape index: {}]
  %s3 = inlined_call_operand.vmem [shape: f32[16,8], index: 3, kind: input, shape index: {}]
  %s4 = inlined_call_operand.vmem [shape: f32[1,8], index: 4, kind: input, shape index: {}]
  %s5 = inlined_call_operand.hbm [shape: f32[2,8,8], index: 5, kind: output, shape index: {}]
  %s6 = sld [smem:[#allocation0]]
  $region57: #{tpu_custom_call.1} parent=0
    _
  %s8 = ssub.s32 1, %s6
  %s9 = scalar_select 0, %s8, %s6
  $region1: #{tpu_custom_call.1} parent=0
    #allocation2 [shape = 'u8[8192]{0}', space=vmem, size = 0x2000, scoped, tag = 'input window, operand 1']
    #allocation3 [shape = 's32[2]{0}', space=sflag, size = 0x8, scoped, tag = 'scoped memory for tpu_custom_call.1']
    #allocation4 [shape = 's32[2]{0}', space=sflag, size = 0x8, scoped, tag = 'scoped memory for tpu_custom_call.1']
    #allocation5 [shape = 'u8[8192]{0}', space=vmem, size = 0x2000, scoped, tag = 'output window, operand 0']
    %10 = vsyncpa [#allocation3], 0
    %s11 = scalar_lea.sflag [#allocation3], 1
    %12 = vsyncpa %s11, 0
    %13 = vsyncpa [#allocation4], 0
    %s14 = scalar_lea.sflag [#allocation4], 1
    %15 = vsyncpa %s14, 0
    loop: start=0, step=1, limit=4
    $region2: #{tpu_custom_call.1} parent=1 // loop_pre_header
      _
    $region3: #{tpu_custom_call.1} parent=1 // loop_header
      %s17 = sphi 0, %s21
      %p18 = scmp.ge.s32.totalorder %s17, 4
      %s24 = sphi 0, %s36
      %s25 = sphi 0, %s32
      %s26 = sphi 0, %s24
      %s27 = sphi 0, %s25
      %s28 = sphi 0, %s26
      %s29 = sphi 0, %s27
      %s41 = sphi 0, %s43
      %s44 = sphi 0, %s41
      %s45 = sphi 0, %s44
      %s61 = sphi 0, %s45
      %s71 = sphi 0, %s73
      %s74 = sphi 0, %s71
      %s75 = sphi 0, %s74
      %s91 = sphi 0, %s75
      %s95 = sphi 0, %s95
      %s97 = sphi 0, %s95
      %s98 = sphi 0, %s97
      %s112 = sphi 0, %s98
      %s116 = sphi 0, %s116
      %s118 = sphi 0, %s116
      %s119 = sphi 0, %s118
      %s133 = sphi 0, %s119
      %s137 = sphi 0, %s137
      %s139 = sphi 0, %s137
      %s140 = sphi 0, %s139
      %s154 = sphi 0, %s140
      %s162 = sphi 0, %s164
      %s165 = sphi 0, %s162
      %s166 = sphi 0, %s165
      %s182 = sphi 0, %s166
    $region4: #{tpu_custom_call.1} parent=1 // loop_header_branch
      %20 = sbr.rel (%p18) target = $region8
    $region5: #{tpu_custom_call.1} parent=1 // loop_body
      %s22 = ssub.s32 %s17, 1
      %s23 = ssub.s32 %s17, 2
      %s30 = sadd.s32 1, %s25
      %p31 = scmp.ge.s32.totalorder %s30, 1
      %s32 = scalar_select %p31, 0, %s30
      %s33 = sadd.s32 1, %s24
      %s34 = scalar_select %p31, %s33, %s24
      %p35 = scmp.ge.s32.totalorder %s34, 2
      %s36 = scalar_select %p35, 0, %s34
      %s37 = ssub.s32 %s24, %s36
      %s38 = ssub.s32 %s25, %s32
      %s39 = sor.u32 %s37, %s38
      %p40 = scmp.eq.s32.totalorder %s39, 0
      %s42 = sadd.s32 %s41, 1
      %s43 = scalar_select %p40, %s41, %s42
      %p46 = pneg %p40
      %p47 = scmp.eq.s32.totalorder %s17, 1
      %p48 = por %p46, %p47
      %p49 = scmp.ne.s32.totalorder %s41, %s44
      %p50 = scmp.eq.s32.totalorder %s17, 0
      %p51 = por %p49, %p50
      %p52 = scmp.ne.s32.totalorder %s41, %s44
      %p53 = scmp.eq.s32.totalorder %s22, 1
      %p54 = por %p52, %p53
      %p55 = scmp.ne.s32.totalorder %s44, %s45
      %p56 = scmp.eq.s32.totalorder %s22, 0
      %p57 = por %p55, %p56
      %p58 = scmp.ne.s32.totalorder %s44, %s45
      %p59 = scmp.eq.s32.totalorder %s23, 1
      %p60 = por %p58, %p59
      %p62 = scmp.ne.s32.totalorder %s45, %s61
      %p63 = scmp.eq.s32.totalorder %s23, 0
      %p64 = por %p62, %p63
      %s65 = sadd.s32 %s25, 1
      %s66 = sadd.s32 %s32, 1
      %s67 = ssub.s32 %s24, %s36
      %s68 = ssub.s32 %s65, %s66
      %s69 = sor.u32 %s67, %s68
      %p70 = scmp.eq.s32.totalorder %s69, 0
      %s72 = sadd.s32 %s71, 1
      %s73 = scalar_select %p70, %s71, %s72
      %p76 = pneg %p70
      %p77 = scmp.eq.s32.totalorder %s17, 1
      %p78 = por %p76, %p77
      %p79 = scmp.ne.s32.totalorder %s71, %s74
      %p80 = scmp.eq.s32.totalorder %s17, 0
      %p81 = por %p79, %p80
      %p82 = scmp.ne.s32.totalorder %s71, %s74
      %p83 = scmp.eq.s32.totalorder %s22, 1
      %p84 = por %p82, %p83
      %p85 = scmp.ne.s32.totalorder %s74, %s75
      %p86 = scmp.eq.s32.totalorder %s22, 0
      %p87 = por %p85, %p86
      %p88 = scmp.ne.s32.totalorder %s74, %s75
      %p89 = scmp.eq.s32.totalorder %s23, 1
      %p90 = por %p88, %p89
      %p92 = scmp.ne.s32.totalorder %s75, %s91
      %p93 = scmp.eq.s32.totalorder %s23, 0
      %p94 = por %p92, %p93
      %s96 = sadd.s32 %s95, 1
      %p99 = scmp.eq.s32.totalorder %s17, 1
      %p100 = scmp.ne.s32.totalorder %s95, %s97
      %p101 = scmp.eq.s32.totalorder %s17, 0
      %p102 = por %p100, %p101
      %p103 = scmp.ne.s32.totalorder %s95, %s97
      %p104 = scmp.eq.s32.totalorder %s22, 1
      %p105 = por %p103, %p104
      %p106 = scmp.ne.s32.totalorder %s97, %s98
      %p107 = scmp.eq.s32.totalorder %s22, 0
      %p108 = por %p106, %p107
      %p109 = scmp.ne.s32.totalorder %s97, %s98
      %p110 = scmp.eq.s32.totalorder %s23, 1
      %p111 = por %p109, %p110
      %p113 = scmp.ne.s32.totalorder %s98, %s112
      %p114 = scmp.eq.s32.totalorder %s23, 0
      %p115 = por %p113, %p114
      %s117 = sadd.s32 %s116, 1
      %p120 = scmp.eq.s32.totalorder %s17, 1
      %p121 = scmp.ne.s32.totalorder %s116, %s118
      %p122 = scmp.eq.s32.totalorder %s17, 0
      %p123 = por %p121, %p122
      %p124 = scmp.ne.s32.totalorder %s116, %s118
      %p125 = scmp.eq.s32.totalorder %s22, 1
      %p126 = por %p124, %p125
      %p127 = scmp.ne.s32.totalorder %s118, %s119
      %p128 = scmp.eq.s32.totalorder %s22, 0
      %p129 = por %p127, %p128
      %p130 = scmp.ne.s32.totalorder %s118, %s119
      %p131 = scmp.eq.s32.totalorder %s23, 1
      %p132 = por %p130, %p131
      %p134 = scmp.ne.s32.totalorder %s119, %s133
      %p135 = scmp.eq.s32.totalorder %s23, 0
      %p136 = por %p134, %p135
      %s138 = sadd.s32 %s137, 1
      %p141 = scmp.eq.s32.totalorder %s17, 1
      %p142 = scmp.ne.s32.totalorder %s137, %s139
      %p143 = scmp.eq.s32.totalorder %s17, 0
      %p144 = por %p142, %p143
      %p145 = scmp.ne.s32.totalorder %s137, %s139
      %p146 = scmp.eq.s32.totalorder %s22, 1
      %p147 = por %p145, %p146
      %p148 = scmp.ne.s32.totalorder %s139, %s140
      %p149 = scmp.eq.s32.totalorder %s22, 0
      %p150 = por %p148, %p149
      %p151 = scmp.ne.s32.totalorder %s139, %s140
      %p152 = scmp.eq.s32.totalorder %s23, 1
      %p153 = por %p151, %p152
      %p155 = scmp.ne.s32.totalorder %s140, %s154
      %p156 = scmp.eq.s32.totalorder %s23, 0
      %p157 = por %p155, %p156
      %s158 = ssub.s32 %s24, %s36
      %s159 = ssub.s32 %s25, %s32
      %s160 = sor.u32 %s158, %s159
      %p161 = scmp.eq.s32.totalorder %s160, 0
      %s163 = sadd.s32 %s162, 1
      %s164 = scalar_select %p161, %s162, %s163
      %p167 = pneg %p161
      %p168 = scmp.eq.s32.totalorder %s17, 1
      %p169 = por %p167, %p168
      %p170 = scmp.ne.s32.totalorder %s162, %s165
      %p171 = scmp.eq.s32.totalorder %s17, 0
      %p172 = por %p170, %p171
      %p173 = scmp.ne.s32.totalorder %s162, %s165
      %p174 = scmp.eq.s32.totalorder %s22, 1
      %p175 = por %p173, %p174
      %p176 = scmp.ne.s32.totalorder %s165, %s166
      %p177 = scmp.eq.s32.totalorder %s22, 0
      %p178 = por %p176, %p177
      %p179 = scmp.ne.s32.totalorder %s165, %s166
      %p180 = scmp.eq.s32.totalorder %s23, 1
      %p181 = por %p179, %p180
      %p183 = scmp.ne.s32.totalorder %s166, %s182
      %p184 = scmp.eq.s32.totalorder %s23, 0
      %p185 = por %p183, %p184
      %p186 = scmp.le.s32.totalorder 1, %s17
      %p187 = scmp.lt.s32.totalorder %s17, 3
      %p188 = pnand %p186, %p187
      %p189 = pneg %p188
      // Predicated region
      $region9: #{tpu_custom_call.1} parent=5 // pred_check
        _
      $region10: #{tpu_custom_call.1} parent=5 // pred_check_branch
        %191 = sbr.rel (%p188) target = $region12
      $region11: #{tpu_custom_call.1} parent=5 // pred_region
        %s192 = ssub.s32 %s17, 1
        // Predicated region
        $region13: #{tpu_custom_call.1} parent=11 // pred_check
          %p193 = pneg %p108
        $region14: #{tpu_custom_call.1} parent=11 // pred_check_branch
          %195 = sbr.rel (%p193) target = $region16
        $region15: #{tpu_custom_call.1} parent=11 // pred_region
          _
        $region16: #{tpu_custom_call.1} parent=11 // pred_fallthru
          _
        // Predicated region
        $region17: #{tpu_custom_call.1} parent=11 // pred_check
          %p196 = pneg %p129
        $region18: #{tpu_custom_call.1} parent=11 // pred_check_branch
          %198 = sbr.rel (%p196) target = $region20
        $region19: #{tpu_custom_call.1} parent=11 // pred_region
          _
        $region20: #{tpu_custom_call.1} parent=11 // pred_fallthru
          _
        // Predicated region
        $region21: #{tpu_custom_call.1} parent=11 // pred_check
          %p199 = pneg %p150
        $region22: #{tpu_custom_call.1} parent=11 // pred_check_branch
          %201 = sbr.rel (%p199) target = $region24
        $region23: #{tpu_custom_call.1} parent=11 // pred_region
          _
        $region24: #{tpu_custom_call.1} parent=11 // pred_fallthru
          _
      $region12: #{tpu_custom_call.1} parent=5 // pred_fallthru
        _
      %p202 = scmp.lt.s32.totalorder %s17, 2
      // Predicated region
      $region25: #{tpu_custom_call.1} parent=5 // pred_check
        %p203 = pneg %p202
      $region26: #{tpu_custom_call.1} parent=5 // pred_check_branch
        %205 = sbr.rel (%p203) target = $region28
      $region27: #{tpu_custom_call.1} parent=5 // pred_region
        // Predicated region
        $region29: #{tpu_custom_call.1} parent=27 // pred_check
          %p206 = pneg %p51
        $region30: #{tpu_custom_call.1} parent=27 // pred_check_branch
          %208 = sbr.rel (%p206) target = $region32
        $region31: #{tpu_custom_call.1} parent=27 // pred_region
          %p209 = scmp.lt.s32.totalorder %s24, 1
          %s210 = scalar_select %p209, %s24, 1
          %p211 = scmp.lt.s32.totalorder %s25, 1
          %s212 = scalar_select %p211, %s25, 1
          %s213 = smul.addr %s210, 2
          %s214 = sadd.s32 %s212, %s213
          %s215 = smul.addr %s214, 8
          %s216 = scalar_lea.vmem %s0, %s215
        $region32: #{tpu_custom_call.1} parent=27 // pred_fallthru
          _
        // Predicated region
        $region33: #{tpu_custom_call.1} parent=27 // pred_check
          %p217 = pneg %p81
        $region34: #{tpu_custom_call.1} parent=27 // pred_check_branch
          %219 = sbr.rel (%p217) target = $region36
        $region35: #{tpu_custom_call.1} parent=27 // pred_region
          %s220 = sand.u32 %s71, 1
          %s221 = scalar_lea.sflag [#allocation3], %s220
          %s222 = sand.u32 %s71, 1
          %s223 = smul.addr %s222, 8
          %s224 = scalar_lea.vmem [#allocation2], %s223
          %s225 = sadd.s32 %s25, 1
          %s227 = ssub.s32 128, 128
          %228 = vsyncadd %s221, %s227
          %s229 = smul.addr %s24, 2
          %s230 = sadd.s32 %s225, %s229
          %s231 = smul.addr %s230, 128
          %s232 = scalar_lea.hbm %s1, %s231
          %s234 = sshll.u32 %s224, 4
          %s235 = int_to_ptr.vmem [resolvable:$true] %s234
          %237 = dma.hbm_to_vmem [thread:$0]  %s232, 128, %s235, %s221
        $region36: #{tpu_custom_call.1} parent=27 // pred_fallthru
          _
      $region28: #{tpu_custom_call.1} parent=5 // pred_fallthru
        _
      %p238 = scmp.le.s32.totalorder 1, %s17
      %p239 = scmp.lt.s32.totalorder %s17, 3
      %p240 = pnand %p238, %p239
      %p241 = pneg %p240
      // Predicated region
      $region37: #{tpu_custom_call.1} parent=5 // pred_check
        _
      $region38: #{tpu_custom_call.1} parent=5 // pred_check_branch
        %243 = sbr.rel (%p240) target = $region40
      $region39: #{tpu_custom_call.1} parent=5 // pred_region
        %s244 = ssub.s32 %s17, 1
        %s245 = sand.u32 %s74, 1
        %s246 = scalar_lea.sflag [#allocation3], %s245
        %s247 = sand.u32 %s74, 1
        %s248 = smul.addr %s247, 8
        %s249 = scalar_lea.vmem [#allocation2], %s248
        // Predicated region
        $region41: #{tpu_custom_call.1} parent=39 // pred_check
          %p250 = pneg %p87
        $region42: #{tpu_custom_call.1} parent=39 // pred_check_branch
          %252 = sbr.rel (%p250) target = $region44
        $region43: #{tpu_custom_call.1} parent=39 // pred_region
          %253 = dma.done %s246, 128
        $region44: #{tpu_custom_call.1} parent=39 // pred_fallthru
          _
        %p254 = scmp.lt.s32.totalorder %s26, 1
        %s255 = scalar_select %p254, %s26, 1
        %p256 = scmp.lt.s32.totalorder %s27, 1
        %s257 = scalar_select %p256, %s27, 1
        %s258 = smul.addr %s255, 2
        %s259 = sadd.s32 %s257, %s258
        %s260 = smul.addr %s259, 8
        %s261 = scalar_lea.vmem %s0, %s260
        %p262 = pneg %p57
        %p263 = pneg %p54
        %s264 = sand.u32 %s74, 1
        %s265 = scalar_lea.sflag [#allocation3], %s264
        %s266 = sand.u32 %s74, 1
        %s267 = smul.addr %s266, 8
        %s268 = scalar_lea.vmem [#allocation2], %s267
        %p269 = pneg %p87
        %p270 = pneg %p84
        %p271 = pneg %p108
        %p272 = pneg %p105
        %p273 = pneg %p129
        %p274 = pneg %p126
        %p275 = pneg %p150
        %p276 = pneg %p147
        %p277 = pneg %p178
        %p278 = pneg %p175
        %s279 = sand.u32 %s165, 1
        %s280 = scalar_lea.sflag [#allocation4], %s279
        %s281 = sand.u32 %s165, 1
        %s282 = smul.addr %s281, 8
        %s283 = scalar_lea.vmem [#allocation5], %s282
        %p284 = scmp.lt.s32.totalorder %s26, 1
        %s285 = scalar_select %p284, %s26, 1
        %p286 = scmp.lt.s32.totalorder %s27, 1
        %s287 = scalar_select %p286, %s27, 1
        %s288 = smul.addr %s285, 2
        %s289 = sadd.s32 %s287, %s288
        %s290 = smul.addr %s289, 8
        %s291 = scalar_lea.vmem %s0, %s290
        %s292 = sadd.s32 %s27, 1
        %v293 = vld [vmem:[%s291] sm:$0xff]
        %v294 = vld [vmem:[%s249] sm:$0xff]
        %v296 = vrot.slane %v293, 1
        %v299 = vrot.slane %v294, 1
        %vm301 = vcmask 1046528
        %v302 = vsel %vm301, %v296, %v299
        %v303 = vld [vmem:[%s2] sm:$0xff]
        %v304 = vld [vmem:[%s2 + $0x8] sm:$0xff]
        %v305 = vld [vmem:[%s3] sm:$0xff]
        %v306 = vld [vmem:[%s3 + $0x8] sm:$0xff]
        %vm307 = vcmask 130048
        %v309 = vsel %vm307, %v302, 0
        %311 = vmatprep.subr.mxu0 0.0
        %312 = vmatpush1.msra.mxu0 %v305
        %313 = vmatprep.subr.mxu0 0.0
        %314 = vmatpush1.msra.mxu0 %v306
        %315 = vmatprep.subr.mxu0 0.0
        %316 = vmatpush1.msra.mxu0 0.0
        %317 = vmatprep.subr.mxu0 0.0
        %318 = vmatpush1.msra.mxu0 0.0
        %319 = vmatprep.subr.mxu0 0.0
        %320 = vmatpush1.msra.mxu0 0.0
        %321 = vmatprep.subr.mxu0 0.0
        %322 = vmatpush1.msra.mxu0 0.0
        %323 = vmatprep.subr.mxu0 0.0
        %324 = vmatpush1.msra.mxu0 0.0
        %325 = vmatprep.subr.mxu0 0.0
        %326 = vmatpush1.msra.mxu0 0.0
        %327 = vmatprep.subr.mxu0 0.0
        %328 = vmatpush1.msra.mxu0 0.0
        %329 = vmatprep.subr.mxu0 0.0
        %330 = vmatpush1.msra.mxu0 0.0
        %331 = vmatprep.subr.mxu0 0.0
        %332 = vmatpush1.msra.mxu0 0.0
        %333 = vmatprep.subr.mxu0 0.0
        %334 = vmatpush1.msra.mxu0 0.0
        %335 = vmatprep.subr.mxu0 0.0
        %336 = vmatpush1.msra.mxu0 0.0
        %337 = vmatprep.subr.mxu0 0.0
        %338 = vmatpush1.msra.mxu0 0.0
        %339 = vmatprep.subr.mxu0 0.0
        %340 = vmatpush1.msra.mxu0 0.0
        %341 = vmatprep.subr.mxu0 0.0
        %342 = vmatpush1.msra.mxu0 0.0
        %343 = vmatprep.subr.mxu0 0.0
        %344 = vmatpush1.msra.mxu0 0.0
        %345 = vmatprep.subr.mxu0 0.0
        %346 = vmatpush1.msra.mxu0 0.0
        %347 = vmatprep.subr.mxu0 0.0
        %348 = vmatpush1.msra.mxu0 0.0
        %349 = vmatprep.subr.mxu0 0.0
        %350 = vmatpush1.msra.mxu0 0.0
        %351 = vmatprep.subr.mxu0 0.0
        %352 = vmatpush1.msra.mxu0 0.0
        %353 = vmatprep.subr.mxu0 0.0
        %354 = vmatpush1.msra.mxu0 0.0
        %355 = vmatprep.subr.mxu0 0.0
        %356 = vmatpush1.msra.mxu0 0.0
        %357 = vmatprep.subr.mxu0 0.0
        %358 = vmatpush1.msra.mxu0 0.0
        %359 = vmatprep.subr.mxu0 0.0
        %360 = vmatpush1.msra.mxu0 0.0
        %361 = vmatprep.subr.mxu0 0.0
        %362 = vmatpush1.msra.mxu0 0.0
        %363 = vmatprep.subr.mxu0 0.0
        %364 = vmatpush1.msra.mxu0 0.0
        %365 = vmatprep.subr.mxu0 0.0
        %366 = vmatpush1.msra.mxu0 0.0
        %367 = vmatprep.subr.mxu0 0.0
        %368 = vmatpush1.msra.mxu0 0.0
        %369 = vmatprep.subr.mxu0 0.0
        %370 = vmatpush1.msra.mxu0 0.0
        %371 = vmatprep.subr.mxu0 0.0
        %372 = vmatpush1.msra.mxu0 0.0
        %373 = vmatprep.subr.mxu0 0.0
        %374 = vmatpush1.msra.mxu0 0.0
        %375 = vmatprep.mubr.f32.mxu0 0.0
        %376 = vmatmul.mubr.f32.gmra.mrb[0].mxu0 %v309
        %v377 = vpop.f32.mrb[0].mxu0
        %v378 = vadd.f32 0.0, %v377
        %v379 = vpop.f32.mrb[0].mxu0
        %380 = vdwg.mxu0
        %v381 = vsel %vm307, %v293, 0
        %383 = vmatprep.subr.mxu0 0.0
        %384 = vmatpush1.msra.mxu0 %v303
        %385 = vmatprep.subr.mxu0 0.0
        %386 = vmatpush1.msra.mxu0 %v304
        %387 = vmatprep.subr.mxu0 0.0
        %388 = vmatpush1.msra.mxu0 0.0
        %389 = vmatprep.subr.mxu0 0.0
        %390 = vmatpush1.msra.mxu0 0.0
        %391 = vmatprep.subr.mxu0 0.0
        %392 = vmatpush1.msra.mxu0 0.0
        %393 = vmatprep.subr.mxu0 0.0
        %394 = vmatpush1.msra.mxu0 0.0
        %395 = vmatprep.subr.mxu0 0.0
        %396 = vmatpush1.msra.mxu0 0.0
        %397 = vmatprep.subr.mxu0 0.0
        %398 = vmatpush1.msra.mxu0 0.0
        %399 = vmatprep.subr.mxu0 0.0
        %400 = vmatpush1.msra.mxu0 0.0
        %401 = vmatprep.subr.mxu0 0.0
        %402 = vmatpush1.msra.mxu0 0.0
        %403 = vmatprep.subr.mxu0 0.0
        %404 = vmatpush1.msra.mxu0 0.0
        %405 = vmatprep.subr.mxu0 0.0
        %406 = vmatpush1.msra.mxu0 0.0
        %407 = vmatprep.subr.mxu0 0.0
        %408 = vmatpush1.msra.mxu0 0.0
        %409 = vmatprep.subr.mxu0 0.0
        %410 = vmatpush1.msra.mxu0 0.0
        %411 = vmatprep.subr.mxu0 0.0
        %412 = vmatpush1.msra.mxu0 0.0
        %413 = vmatprep.subr.mxu0 0.0
        %414 = vmatpush1.msra.mxu0 0.0
        %415 = vmatprep.subr.mxu0 0.0
        %416 = vmatpush1.msra.mxu0 0.0
        %417 = vmatprep.subr.mxu0 0.0
        %418 = vmatpush1.msra.mxu0 0.0
        %419 = vmatprep.subr.mxu0 0.0
        %420 = vmatpush1.msra.mxu0 0.0
        %421 = vmatprep.subr.mxu0 0.0
        %422 = vmatpush1.msra.mxu0 0.0
        %423 = vmatprep.subr.mxu0 0.0
        %424 = vmatpush1.msra.mxu0 0.0
        %425 = vmatprep.subr.mxu0 0.0
        %426 = vmatpush1.msra.mxu0 0.0
        %427 = vmatprep.subr.mxu0 0.0
        %428 = vmatpush1.msra.mxu0 0.0
        %429 = vmatprep.subr.mxu0 0.0
        %430 = vmatpush1.msra.mxu0 0.0
        %431 = vmatprep.subr.mxu0 0.0
        %432 = vmatpush1.msra.mxu0 0.0
        %433 = vmatprep.subr.mxu0 0.0
        %434 = vmatpush1.msra.mxu0 0.0
        %435 = vmatprep.subr.mxu0 0.0
        %436 = vmatpush1.msra.mxu0 0.0
        %437 = vmatprep.subr.mxu0 0.0
        %438 = vmatpush1.msra.mxu0 0.0
        %439 = vmatprep.subr.mxu0 0.0
        %440 = vmatpush1.msra.mxu0 0.0
        %441 = vmatprep.subr.mxu0 0.0
        %442 = vmatpush1.msra.mxu0 0.0
        %443 = vmatprep.subr.mxu0 0.0
        %444 = vmatpush1.msra.mxu0 0.0
        %445 = vmatprep.subr.mxu0 0.0
        %446 = vmatpush1.msra.mxu0 0.0
        %447 = vmatprep.mubr.f32.mxu0 0.0
        %448 = vmatmul.mubr.f32.gmra.mrb[0].mxu0 %v381
        %v449 = vpop.f32.mrb[0].mxu0
        %v450 = vadd.f32 %v378, %v449
        %v451 = vpop.f32.mrb[0].mxu0
        %452 = vdwg.mxu0
        %v453 = vld [vmem:[%s4] sm:$0x1]
        %v455 = vlaneseq
        %v456 = vshrl.u32 %v455, 7
        %v457 = vsub.s32 0, %v456
        %v458 = vrot.slane %v453, %v457
        %v460 = vadd.f32 %v450, %v458
        %vm461 = vcmask 64512
        %462 = vst.msk [vmem:[%s283] sm:$0xff] %vm461, %v460
        %s463 = sand.u32 %s165, 1
        %s464 = scalar_lea.sflag [#allocation4], %s463
        %s465 = sand.u32 %s165, 1
        %s466 = smul.addr %s465, 8
        %s467 = scalar_lea.vmem [#allocation5], %s466
        // Predicated region
        $region45: #{tpu_custom_call.1} parent=39 // pred_check
          %p468 = pneg %p175
        $region46: #{tpu_custom_call.1} parent=39 // pred_check_branch
          %470 = sbr.rel (%p468) target = $region48
        $region47: #{tpu_custom_call.1} parent=39 // pred_region
          %s472 = ssub.s32 128, 128
          %473 = vsyncadd %s464, %s472
          %s474 = sadd.s32 %s27, %s26
          %s475 = smul.addr %s474, 128
          %s476 = scalar_lea.hbm %s5, %s475
          %s478 = sshll.u32 %s467, 4
          %s479 = int_to_ptr.vmem [resolvable:$true] %s478
          %481 = dma.vmem_to_hbm [thread:$0]  %s479, 128, %s476, %s464
        $region48: #{tpu_custom_call.1} parent=39 // pred_fallthru
          _
      $region40: #{tpu_custom_call.1} parent=5 // pred_fallthru
        _
      %p482 = scmp.le.s32.totalorder 2, %s17
      // Predicated region
      $region49: #{tpu_custom_call.1} parent=5 // pred_check
        %p483 = pneg %p482
      $region50: #{tpu_custom_call.1} parent=5 // pred_check_branch
        %485 = sbr.rel (%p483) target = $region52
      $region51: #{tpu_custom_call.1} parent=5 // pred_region
        %s486 = ssub.s32 %s17, 2
        // Predicated region
        $region53: #{tpu_custom_call.1} parent=51 // pred_check
          %p487 = pneg %p181
        $region54: #{tpu_custom_call.1} parent=51 // pred_check_branch
          %489 = sbr.rel (%p487) target = $region56
        $region55: #{tpu_custom_call.1} parent=51 // pred_region
          %s490 = sand.u32 %s166, 1
          %s491 = scalar_lea.sflag [#allocation4], %s490
          %s492 = sand.u32 %s166, 1
          %s493 = smul.addr %s492, 8
          %s494 = scalar_lea.vmem [#allocation5], %s493
          %495 = dma.done %s491, 128
        $region56: #{tpu_custom_call.1} parent=51 // pred_fallthru
          _
      $region52: #{tpu_custom_call.1} parent=5 // pred_fallthru
        _
    $region6: #{tpu_custom_call.1} parent=1 // loop_footer
      %s21 = sadd.s32 1, %s17
    $region7: #{tpu_custom_call.1} parent=1 // loop_footer_branch
      %16 = sbr.rel target = $region3
    $region8: #{tpu_custom_call.1} parent=1 // loop_exit
      _
    %496 = vsyncpa [#allocation3], 1
    %s497 = scalar_lea.sflag [#allocation3], 1
    %498 = vsyncpa %s497, 1
    %499 = vsyncpa [#allocation4], 1
    %s500 = scalar_lea.sflag [#allocation4], 1
    %501 = vsyncpa %s500, 1

</llo_original>
